<compile_context>
chip_gen: v6e
topology: v6e:2x2x1
jax: 0.10.0
libtpu: 0.0.40
codegen_flags: <defaults>
</compile_context>

<pallas_src>
import jax
import jax.numpy as jnp
from jax.experimental import pallas as pl
from jax.experimental.pallas import tpu as pltpu


def _round_up(a: int, m: int) -> int:
    return ((a + m - 1) // m) * m


def _cdiv(a: int, b: int) -> int:
    return (a + b - 1) // b


def curvature_mlp_kernel(x_ref, w1_ref, b1_ref, w2_ref, b2_ref, out_ref):
    # Shapes (P = samples packed per lane-row, F = nfeat, H = nhid, R = rows/tile):
    #   x_ref  : [R, P*F]   bf16  (P consecutive samples concatenated along lanes)
    #   w1_ref : [P*F, P*H] bf16  block-diagonal (P copies of W1^T)
    #   b1_ref : [1, P*H]   f32   (b1 tiled P times)
    #   w2_ref : [P*H, P]   f32   block-diagonal (P copies of w2^T)
    #   b2_ref : [1, 1]     f32
    #   out_ref: [R, P]     f32   out[i, k] = sigmoid(y) of sample P*i + k
    h = jnp.dot(x_ref[...], w1_ref[...], preferred_element_type=jnp.float32)
    h = jnp.maximum(h + b1_ref[...], 0.0)
    # fc2 as a second (tiny-N) MXU matmul: contraction over H happens inside the
    # MXU (no VPU-mul + cross-lane XLU reduce), and the result keeps P samples
    # per lane-row so the sigmoid/store epilogue is not 1-useful-lane-per-vreg.
    y = jnp.dot(h, w2_ref[...], preferred_element_type=jnp.float32) + b2_ref[...]
    out_ref[...] = jax.nn.sigmoid(y).astype(out_ref.dtype)


def curvature_mlp(x, w1, b1, w2, b2, *, tile_n: int = 32768):
    """x: [N, nfeat]; w1: [nhid, nfeat]; b1: [nhid]; w2: [1, nhid]; b2: [1].

    Returns sigmoid(fc2(relu(fc1(x)))) with shape [N, 1] (float32).
    `tile_n` is the number of samples processed per grid step.
    """
    N, F = x.shape
    H = w1.shape[0]

    # Lane-packing factor: pack `pack` samples per 128-lane row (4 for F=H=32).
    # Degrades gracefully to 1 for wide features.
    pack = max(1, min(128 // F, 128 // H))

    # ---- Parameter prep (tiny; weights stay VMEM-resident across the grid) ----
    eye = jnp.eye(pack, dtype=jnp.float32)
    w1b = jnp.kron(eye, jnp.asarray(w1, jnp.float32).T).astype(jnp.bfloat16)  # [p*F, p*H]
    b1b = jnp.tile(jnp.asarray(b1, jnp.float32).reshape(-1), pack).reshape(1, pack * H)
    w2b = jnp.kron(eye, jnp.asarray(w2, jnp.float32).reshape(H, 1))           # [p*H, p]
    b2r = jnp.asarray(b2, jnp.float32).reshape(1, 1)

    # ---- Stream prep: bf16 x, `pack` samples per lane-row ----------------------
    # cast + (rare) pad + reshape fuse into at most one producer-side pass;
    # zero extra passes if the producer already emits bf16 and N % pack == 0.
    n4 = _round_up(N, pack)
    x_s = jnp.asarray(x, jnp.bfloat16)
    if n4 != N:
        x_s = jnp.pad(x_s, ((0, n4 - N), (0, 0)))   # padded rows are sliced off below
    rows = n4 // pack
    x_s = x_s.reshape(rows, pack * F)                # free row-major reshape

    # ---- Row tiling ------------------------------------------------------------
    # Large tiles amortize the ~0.35 us per-step fixed cost; cap at half the work
    # (rounded to the 8-sublane granule) so the grid has >= 2 steps whenever
    # possible and both v7x TensorCores get rows. Boundary blocks that overrun
    # `rows` are masked by Pallas (reads undefined -> rows dropped on write).
    want = _round_up(max(tile_n // pack, 8), 8)
    half = _round_up(_cdiv(rows, 2), 8)
    tile_rows = max(8, min(want, half))
    grid = (_cdiv(rows, tile_rows),)

    # VMEM per step (worst case, tile_rows=8192): x 2 MiB + out <=4 MiB, double
    # buffered -> ~12 MiB + tiny weights; 32 MiB scoped limit is safe on
    # v5e/v6e/v7x.  (Optionally sweep pipeline_mode=pl.Buffered(3) on the x spec.)
    out = pl.pallas_call(
        curvature_mlp_kernel,
        out_shape=jax.ShapeDtypeStruct((rows, pack), jnp.float32),
        grid=grid,
        in_specs=[
            pl.BlockSpec((tile_rows, pack * F), lambda i: (i, 0)),  # x: streamed per tile
            pl.BlockSpec((pack * F, pack * H), lambda i: (0, 0)),   # W1 block-diag: resident
            pl.BlockSpec((1, pack * H), lambda i: (0, 0)),          # b1 (tiled): resident
            pl.BlockSpec((pack * H, pack), lambda i: (0, 0)),       # W2 block-diag: resident
            pl.BlockSpec((1, 1), lambda i: (0, 0)),                 # b2: resident
        ],
        out_specs=pl.BlockSpec((tile_rows, pack), lambda i: (i, 0)),
        compiler_params=pltpu.CompilerParams(
            dimension_semantics=("parallel",),       # independent row tiles -> both v7x TCs
            vmem_limit_bytes=32 * 1024 * 1024,
        ),
    )(x_s, w1b, b1b, w2b, b2r)

    # out[i, k] is sample pack*i + k -> contiguous row-major reshape back to [N, 1].
    return out.reshape(n4, 1)[:N]


def _ref_forward(x, w1, b1, w2, b2):
    # Pure-JAX f32 reference mirroring the PyTorch module.
    h = jnp.maximum(x @ w1.T + b1, 0.0)
    y = h @ w2.T + b2
    return jax.nn.sigmoid(y)


if __name__ == "__main__":
    NFEAT, NHID = 32, 32

    key = jax.random.PRNGKey(0)
    kx, kw1, kb1, kw2, kb2, kx2 = jax.random.split(key, 6)

    # Deterministic synthetic parameters (shapes match nn.Linear):
    # fc1: weight [nhid, nfeat], bias [nhid]; fc2: weight [1, nhid], bias [1].
    bound1 = 1.0 / (NFEAT ** 0.5)
    w1 = jax.random.uniform(kw1, (NHID, NFEAT), minval=-bound1, maxval=bound1, dtype=jnp.float32)
    b1 = jax.random.uniform(kb1, (NHID,), minval=-bound1, maxval=bound1, dtype=jnp.float32)
    bound2 = 1.0 / (NHID ** 0.5)
    w2 = jax.random.uniform(kw2, (1, NHID), minval=-bound2, maxval=bound2, dtype=jnp.float32)
    b2 = jax.random.uniform(kb2, (1,), minval=-bound2, maxval=bound2, dtype=jnp.float32)

    # bf16 x stream + default MXU precision -> compare with a loose tolerance.
    TOL = 1e-2

    # Case 1: small batch, single exact grid step (no boundary masking).
    x_small = jax.random.normal(kx, (32, NFEAT), dtype=jnp.float32)
    out_small = jax.block_until_ready(curvature_mlp(x_small, w1, b1, w2, b2))
    ref_small = _ref_forward(x_small, w1, b1, w2, b2)
    assert out_small.shape == (32, 1)
    assert float(jnp.max(jnp.abs(out_small - ref_small))) < TOL

    # Case 2: batch that is neither a pack nor tile multiple, small tile_n to
    # exercise the multi-step pipelined grid + masked boundary block + reshape path.
    x_big = jax.random.normal(kx2, (301, NFEAT), dtype=jnp.float32)
    out_big = jax.block_until_ready(curvature_mlp(x_big, w1, b1, w2, b2, tile_n=256))
    ref_big = _ref_forward(x_big, w1, b1, w2, b2)
    assert out_big.shape == (301, 1)
    assert float(jnp.max(jnp.abs(out_big - ref_big))) < TOL

    print("KERNEL_OK")
</pallas_src>

<mosaic_0001>
module attributes {stable_mosaic.version = 11 : i64} {
  func.func @curvature_mlp_kernel(%arg0: i32, %arg1: memref<8x128xbf16, #tpu.memory_space<vmem>>, %arg2: memref<128x128xbf16, #tpu.memory_space<vmem>>, %arg3: memref<1x128xf32, #tpu.memory_space<vmem>>, %arg4: memref<128x4xf32, #tpu.memory_space<vmem>>, %arg5: memref<1x1xf32, #tpu.memory_space<vmem>>, %arg6: memref<8x4xf32, #tpu.memory_space<vmem>>) attributes {dimension_semantics = [#tpu.dimension_semantics<parallel>], iteration_bounds = array<i64: 1>, scalar_prefetch = 0 : i64, scratch_operands = 0 : i64, tpu.core_type = #tpu.core_type<tc>, window_params = [{transform_indices = @transform_0, window_bounds = array<i64: 8, 128>}, {pipeline_mode = #tpu.pipeline_mode<synchronous>, transform_indices = @transform_1, window_bounds = array<i64: 128, 128>}, {pipeline_mode = #tpu.pipeline_mode<synchronous>, transform_indices = @transform_2, window_bounds = array<i64: 1, 128>}, {pipeline_mode = #tpu.pipeline_mode<synchronous>, transform_indices = @transform_3, window_bounds = array<i64: 128, 4>}, {pipeline_mode = #tpu.pipeline_mode<synchronous>, transform_indices = @transform_4, window_bounds = array<i64: 1, 1>}, {transform_indices = @transform_5, window_bounds = array<i64: 8, 4>}]} {
    %c0 = arith.constant 0 : index
    %c0_0 = arith.constant 0 : index
    %0 = vector.load %arg1[%c0, %c0_0] : memref<8x128xbf16, #tpu.memory_space<vmem>>, vector<8x128xbf16>
    %c0_1 = arith.constant 0 : index
    %c0_2 = arith.constant 0 : index
    %1 = vector.load %arg2[%c0_1, %c0_2] : memref<128x128xbf16, #tpu.memory_space<vmem>>, vector<128x128xbf16>
    %cst = arith.constant dense<0.000000e+00> : vector<8x128xf32>
    %2 = tpu.matmul %0, %1, %cst {dimension_numbers = #tpu.dot_dimension_numbers<[1], [0], [0], [1], [0, 0, 1, 1], [], []>} : vector<8x128xbf16>, vector<128x128xbf16>, vector<8x128xf32> -> vector<8x128xf32>
    %c0_3 = arith.constant 0 : index
    %c0_4 = arith.constant 0 : index
    %3 = vector.load %arg3[%c0_3, %c0_4] : memref<1x128xf32, #tpu.memory_space<vmem>>, vector<1x128xf32>
    %4 = vector.broadcast %3 : vector<1x128xf32> to vector<8x128xf32>
    %5 = arith.addf %2, %4 : vector<8x128xf32>
    %cst_5 = arith.constant 0.000000e+00 : f32
    %6 = vector.broadcast %cst_5 : f32 to vector<8x128xf32>
    %7 = arith.maximumf %5, %6 : vector<8x128xf32>
    %c0_6 = arith.constant 0 : index
    %c0_7 = arith.constant 0 : index
    %8 = vector.load %arg4[%c0_6, %c0_7] : memref<128x4xf32, #tpu.memory_space<vmem>>, vector<128x4xf32>
    %cst_8 = arith.constant dense<0.000000e+00> : vector<8x4xf32>
    %9 = tpu.matmul %7, %8, %cst_8 {dimension_numbers = #tpu.dot_dimension_numbers<[1], [0], [0], [1], [0, 0, 1, 1], [], []>} : vector<8x128xf32>, vector<128x4xf32>, vector<8x4xf32> -> vector<8x4xf32>
    %c0_9 = arith.constant 0 : index
    %c0_10 = arith.constant 0 : index
    %10 = vector.load %arg5[%c0_9, %c0_10] : memref<1x1xf32, #tpu.memory_space<vmem>>, vector<1x1xf32>
    %11 = vector.broadcast %10 : vector<1x1xf32> to vector<8x4xf32>
    %12 = arith.addf %9, %11 : vector<8x4xf32>
    %13 = arith.negf %12 : vector<8x4xf32>
    %14 = math.exp %13 : vector<8x4xf32>
    %cst_11 = arith.constant 1.000000e+00 : f32
    %15 = vector.broadcast %cst_11 : f32 to vector<8x4xf32>
    %16 = arith.addf %15, %14 : vector<8x4xf32>
    %17 = arith.divf %15, %16 : vector<8x4xf32>
    %c0_12 = arith.constant 0 : index
    %c0_13 = arith.constant 0 : index
    %18 = vector.load %arg6[%c0_12, %c0_13] : memref<8x4xf32, #tpu.memory_space<vmem>>, vector<8x4xf32>
    tpu.vector_store %arg6[%c0_12, %c0_13], %17 {strides = array<i32>} : memref<8x4xf32, #tpu.memory_space<vmem>>, vector<8x4xf32>,
    return
  }
  func.func @transform_0(%arg0: i32) -> (i32, i32) {
    %c0_i32 = arith.constant 0 : i32
    %c0_i32_0 = arith.constant 0 : i32
    return %arg0, %c0_i32 : i32, i32
  }
  func.func @transform_1(%arg0: i32) -> (i32, i32) {
    %c0_i32 = arith.constant 0 : i32
    %c0_i32_0 = arith.constant 0 : i32
    %c0_i32_1 = arith.constant 0 : i32
    return %c0_i32, %c0_i32_0 : i32, i32
  }
  func.func @transform_2(%arg0: i32) -> (i32, i32) {
    %c0_i32 = arith.constant 0 : i32
    %c0_i32_0 = arith.constant 0 : i32
    %c0_i32_1 = arith.constant 0 : i32
    return %c0_i32, %c0_i32_0 : i32, i32
  }
  func.func @transform_3(%arg0: i32) -> (i32, i32) {
    %c0_i32 = arith.constant 0 : i32
    %c0_i32_0 = arith.constant 0 : i32
    %c0_i32_1 = arith.constant 0 : i32
    return %c0_i32, %c0_i32_0 : i32, i32
  }
  func.func @transform_4(%arg0: i32) -> (i32, i32) {
    %c0_i32 = arith.constant 0 : i32
    %c0_i32_0 = arith.constant 0 : i32
    %c0_i32_1 = arith.constant 0 : i32
    return %c0_i32, %c0_i32_0 : i32, i32
  }
  func.func @transform_5(%arg0: i32) -> (i32, i32) {
    %c0_i32 = arith.constant 0 : i32
    %c0_i32_0 = arith.constant 0 : i32
    return %arg0, %c0_i32 : i32, i32
  }
}

</mosaic_0001>

<llo_original>
// kernel: tpu_custom_call.1
$region0: #{tpu_custom_call.1}
  #allocation0 [shape = 'u32[]', space=smem, size = 0x4, offset = 0x4, fixed_abs, tag = 'smem constant byte address 0x4 - core index']
  #allocation1 [shape = 'u32[144,128]{1,0:T(1,128)}', space=vmem, size = 0x12000, scoped, tag = 'internal scratch']
  #allocation2 [shape = 'f32[1,1]{1,0:T(1,128)S(1)}', space=vmem, size = 0x200, scoped, tag = 'scoped memory for tpu_custom_call.1']
  %s0 = inlined_call_operand.vmem [shape: bf16[8,128], index: 0, kind: input, shape index: {}]
  %s1 = inlined_call_operand.vmem [shape: bf16[128,128], index: 1, kind: input, shape index: {}]
  %s2 = inlined_call_operand.vmem [shape: f32[1,128], index: 2, kind: input, shape index: {}]
  %s3 = inlined_call_operand.vmem [shape: f32[128,4], index: 3, kind: input, shape index: {}]
  %s4 = inlined_call_operand.<no memory space> [shape: f32[1,1], index: 4, kind: input, shape index: {}]
  %s5 = inlined_call_operand.vmem [shape: f32[8,4], index: 5, kind: output, shape index: {}]
  %s6 = sld [smem:[#allocation0]]
  $region30: #{tpu_custom_call.1} parent=0
    _
  %s8 = ssub.s32 1, %s6
  %s9 = scalar_select 0, %s8, %s6
  %v10 = vstv %s4
  %11 = vst [vmem:[#allocation2] sm:$0x1] %v10
  // Predicated region
  $region2: #{tpu_custom_call.1} parent=0 // pred_check
    _
  $region3: #{tpu_custom_call.1} parent=0 // pred_check_branch
    %13 = sbr.rel (0) target = $region5
  $region4: #{tpu_custom_call.1} parent=0 // pred_region
    _
  $region5: #{tpu_custom_call.1} parent=0 // pred_fallthru
    _
  // Predicated region
  $region6: #{tpu_custom_call.1} parent=0 // pred_check
    _
  $region7: #{tpu_custom_call.1} parent=0 // pred_check_branch
    %15 = sbr.rel (0) target = $region9
  $region8: #{tpu_custom_call.1} parent=0 // pred_region
    _
  $region9: #{tpu_custom_call.1} parent=0 // pred_fallthru
    _
  // Predicated region
  $region10: #{tpu_custom_call.1} parent=0 // pred_check
    _
  $region11: #{tpu_custom_call.1} parent=0 // pred_check_branch
    %17 = sbr.rel (0) target = $region13
  $region12: #{tpu_custom_call.1} parent=0 // pred_region
    _
  $region13: #{tpu_custom_call.1} parent=0 // pred_fallthru
    _
  // Predicated region
  $region14: #{tpu_custom_call.1} parent=0 // pred_check
    _
  $region15: #{tpu_custom_call.1} parent=0 // pred_check_branch
    %19 = sbr.rel (0) target = $region17
  $region16: #{tpu_custom_call.1} parent=0 // pred_region
    _
  $region17: #{tpu_custom_call.1} parent=0 // pred_fallthru
    _
  // Predicated region
  $region18: #{tpu_custom_call.1} parent=0 // pred_check
    _
  $region19: #{tpu_custom_call.1} parent=0 // pred_check_branch
    %21 = sbr.rel (0) target = $region21
  $region20: #{tpu_custom_call.1} parent=0 // pred_region
    _
  $region21: #{tpu_custom_call.1} parent=0 // pred_fallthru
    _
  %v23 = vld [vmem:[%s0] sm:$0xf]
  %v24 = vld [vmem:[%s1] sm:$0xf]
  %v25 = vld [vmem:[%s1 + $0x4] sm:$0xf]
  %v26 = vld [vmem:[%s1 + $0x8] sm:$0xf]
  %v27 = vld [vmem:[%s1 + $0xc] sm:$0xf]
  %v28 = vld [vmem:[%s1 + $0x10] sm:$0xf]
  %v29 = vld [vmem:[%s1 + $0x14] sm:$0xf]
  %v30 = vld [vmem:[%s1 + $0x18] sm:$0xf]
  %v31 = vld [vmem:[%s1 + $0x1c] sm:$0xf]
  %v32 = vld [vmem:[%s1 + $0x20] sm:$0xf]
  %v33 = vld [vmem:[%s1 + $0x24] sm:$0xf]
  %v34 = vld [vmem:[%s1 + $0x28] sm:$0xf]
  %v35 = vld [vmem:[%s1 + $0x2c] sm:$0xf]
  %v36 = vld [vmem:[%s1 + $0x30] sm:$0xf]
  %v37 = vld [vmem:[%s1 + $0x34] sm:$0xf]
  %v38 = vld [vmem:[%s1 + $0x38] sm:$0xf]
  %v39 = vld [vmem:[%s1 + $0x3c] sm:$0xf]
  %v40 = vld [vmem:[%s2] sm:$0x1]
  %v42 = vlaneseq
  %v43 = vshrl.u32 %v42, 7
  %v44 = vsub.s32 0, %v43
  %v45 = vrot.slane %v40, %v44
  %v63 = vunpack.c.l.b16 %v24
  %v64 = vunpack.c.l.b16 %v25
  %v65 = vunpack.c.l.b16 %v26
  %v66 = vunpack.c.l.b16 %v27
  %v67 = vunpack.c.l.b16 %v28
  %v68 = vunpack.c.l.b16 %v29
  %v69 = vunpack.c.l.b16 %v30
  %v70 = vunpack.c.l.b16 %v31
  %v71 = vunpack.c.l.b16 %v32
  %v72 = vunpack.c.l.b16 %v33
  %v73 = vunpack.c.l.b16 %v34
  %v74 = vunpack.c.l.b16 %v35
  %v75 = vunpack.c.l.b16 %v36
  %v76 = vunpack.c.l.b16 %v37
  %v77 = vunpack.c.l.b16 %v38
  %v78 = vunpack.c.l.b16 %v39
  %v79 = vpack.c.b16 %v64, %v63
  %v80 = vpack.c.b16 %v66, %v65
  %v81 = vpack.c.b16 %v68, %v67
  %v82 = vpack.c.b16 %v70, %v69
  %v83 = vpack.c.b16 %v72, %v71
  %v84 = vpack.c.b16 %v74, %v73
  %v85 = vpack.c.b16 %v76, %v75
  %v86 = vpack.c.b16 %v78, %v77
  %95 = vmatprep.subr.bf16.mxu0 0
  %96 = vmatpush1.bf16.msra.mxu0 %v86
  %97 = vmatprep.subr.bf16.mxu0 0
  %98 = vmatpush1.bf16.msra.mxu0 %v85
  %99 = vmatprep.subr.bf16.mxu0 0
  %100 = vmatpush1.bf16.msra.mxu0 %v84
  %101 = vmatprep.subr.bf16.mxu0 0
  %102 = vmatpush1.bf16.msra.mxu0 %v83
  %103 = vmatprep.subr.bf16.mxu0 0
  %104 = vmatpush1.bf16.msra.mxu0 %v82
  %105 = vmatprep.subr.bf16.mxu0 0
  %106 = vmatpush1.bf16.msra.mxu0 %v81
  %107 = vmatprep.subr.bf16.mxu0 0
  %108 = vmatpush1.bf16.msra.mxu0 %v80
  %109 = vmatprep.subr.bf16.mxu0 0
  %110 = vmatpush1.bf16.msra.mxu0 %v79
  %111 = vmatprep.subr.bf16.mxu0 0
  %112 = vmatpush2.bf16.msra.mxu0 0
  %113 = vmatprep.subr.bf16.mxu0 0
  %114 = vmatpush2.bf16.msra.mxu0 0
  %115 = vmatprep.subr.bf16.mxu0 0
  %116 = vmatpush2.bf16.msra.mxu0 0
  %117 = vmatprep.subr.bf16.mxu0 0
  %118 = vmatpush2.bf16.msra.mxu0 0
  %119 = vmatprep.subr.bf16.mxu0 0
  %120 = vmatpush2.bf16.msra.mxu0 0
  %121 = vmatprep.subr.bf16.mxu0 0
  %122 = vmatpush2.bf16.msra.mxu0 0
  %123 = vmatprep.subr.bf16.mxu0 0
  %124 = vmatpush2.bf16.msra.mxu0 0
  %125 = vmatprep.subr.bf16.mxu0 0
  %126 = vmatpush2.bf16.msra.mxu0 0
  %127 = vmatprep.mubr.bf16.mxu0 0
  %128 = vmatmul.mubr.bf16.gmra.mxu0 %v23
  %v129 = vpop.f32.mrf.mxu0
  %v130 = vadd.f32 %v45, %v129
  %v131 = vpop.f32.mrf.mxu0
  %v132 = vpop.f32.mrf.mxu0
  %v133 = vpop.f32.mrf.mxu0
  %134 = vdwg.mxu0
  %v135 = vmax.f32 %v130, 0.0
  %v136 = vld [vmem:[%s3] sm:$0xff]
  %v137 = vld [vmem:[%s3 + $0x8] sm:$0xff]
  %v138 = vld [vmem:[%s3 + $0x10] sm:$0xff]
  %v139 = vld [vmem:[%s3 + $0x18] sm:$0xff]
  %v140 = vld [vmem:[%s3 + $0x20] sm:$0xff]
  %v141 = vld [vmem:[%s3 + $0x28] sm:$0xff]
  %v142 = vld [vmem:[%s3 + $0x30] sm:$0xff]
  %v143 = vld [vmem:[%s3 + $0x38] sm:$0xff]
  %v144 = vld [vmem:[%s3 + $0x40] sm:$0xff]
  %v145 = vld [vmem:[%s3 + $0x48] sm:$0xff]
  %v146 = vld [vmem:[%s3 + $0x50] sm:$0xff]
  %v147 = vld [vmem:[%s3 + $0x58] sm:$0xff]
  %v148 = vld [vmem:[%s3 + $0x60] sm:$0xff]
  %v149 = vld [vmem:[%s3 + $0x68] sm:$0xff]
  %v150 = vld [vmem:[%s3 + $0x70] sm:$0xff]
  %v151 = vld [vmem:[%s3 + $0x78] sm:$0xff]
  %v152 = vld [vmem:[#allocation2] sm:$0x1]
  %v154 = vlaneseq
  %v155 = vshrl.u32 %v154, 7
  %v156 = vsub.s32 0, %v155
  %v157 = vrot.slane %v152, %v156
  %158 = vset.pattern.permute.xlu0 0
  %159 = vperm.xlu0 %158, %v157
  %v160 = vpop.permute.xlu0 %159
  %162 = vmatprep.subr.mxu0 0.0
  %163 = vmatpush1.msra.mxu0 %v151
  %164 = vmatprep.subr.mxu0 0.0
  %165 = vmatpush1.msra.mxu0 %v150
  %166 = vmatprep.subr.mxu0 0.0
  %167 = vmatpush1.msra.mxu0 %v149
  %168 = vmatprep.subr.mxu0 0.0
  %169 = vmatpush1.msra.mxu0 %v148
  %170 = vmatprep.subr.mxu0 0.0
  %171 = vmatpush1.msra.mxu0 %v147
  %172 = vmatprep.subr.mxu0 0.0
  %173 = vmatpush1.msra.mxu0 %v146
  %174 = vmatprep.subr.mxu0 0.0
  %175 = vmatpush1.msra.mxu0 %v145
  %176 = vmatprep.subr.mxu0 0.0
  %177 = vmatpush1.msra.mxu0 %v144
  %178 = vmatprep.subr.mxu0 0.0
  %179 = vmatpush1.msra.mxu0 %v143
  %180 = vmatprep.subr.mxu0 0.0
  %181 = vmatpush1.msra.mxu0 %v142
  %182 = vmatprep.subr.mxu0 0.0
  %183 = vmatpush1.msra.mxu0 %v141
  %184 = vmatprep.subr.mxu0 0.0
  %185 = vmatpush1.msra.mxu0 %v140
  %186 = vmatprep.subr.mxu0 0.0
  %187 = vmatpush1.msra.mxu0 %v139
  %188 = vmatprep.subr.mxu0 0.0
  %189 = vmatpush1.msra.mxu0 %v138
  %190 = vmatprep.subr.mxu0 0.0
  %191 = vmatpush1.msra.mxu0 %v137
  %192 = vmatprep.subr.mxu0 0.0
  %193 = vmatpush1.msra.mxu0 %v136
  %194 = vmatprep.subr.mxu0 0.0
  %195 = vmatpush2.msra.mxu0 0.0
  %196 = vmatprep.subr.mxu0 0.0
  %197 = vmatpush2.msra.mxu0 0.0
  %198 = vmatprep.subr.mxu0 0.0
  %199 = vmatpush2.msra.mxu0 0.0
  %200 = vmatprep.subr.mxu0 0.0
  %201 = vmatpush2.msra.mxu0 0.0
  %202 = vmatprep.subr.mxu0 0.0
  %203 = vmatpush2.msra.mxu0 0.0
  %204 = vmatprep.subr.mxu0 0.0
  %205 = vmatpush2.msra.mxu0 0.0
  %206 = vmatprep.subr.mxu0 0.0
  %207 = vmatpush2.msra.mxu0 0.0
  %208 = vmatprep.subr.mxu0 0.0
  %209 = vmatpush2.msra.mxu0 0.0
  %210 = vmatprep.subr.mxu0 0.0
  %211 = vmatpush2.msra.mxu0 0.0
  %212 = vmatprep.subr.mxu0 0.0
  %213 = vmatpush2.msra.mxu0 0.0
  %214 = vmatprep.subr.mxu0 0.0
  %215 = vmatpush2.msra.mxu0 0.0
  %216 = vmatprep.subr.mxu0 0.0
  %217 = vmatpush2.msra.mxu0 0.0
  %218 = vmatprep.subr.mxu0 0.0
  %219 = vmatpush2.msra.mxu0 0.0
  %220 = vmatprep.subr.mxu0 0.0
  %221 = vmatpush2.msra.mxu0 0.0
  %222 = vmatprep.subr.mxu0 0.0
  %223 = vmatpush2.msra.mxu0 0.0
  %224 = vmatprep.subr.mxu0 0.0
  %225 = vmatpush2.msra.mxu0 0.0
  %226 = vmatprep.mubr.f32.mxu0 0.0
  %227 = vmatmul.mubr.f32.gmra.mxu0 %v135
  %v228 = vpop.f32.mrf.mxu0
  %v229 = vadd.f32 %v160, %v228
  %v230 = vpop.f32.mrf.mxu0
  %231 = vdwg.mxu0
  %v232 = vxor.u32 %v229, 2147483648
  %v233 = vmul.f32 %v232, 1.442695
  %v234 = vpow.pop %v233
  %v235 = vadd.f32 %v234, 1.0
  %v236 = vrcp.pop %v235
  %v237 = vmul.f32 1.0, %v236
  %vm238 = vcmask 31744
  %239 = vst.msk [vmem:[%s5] sm:$0xff] %vm238, %v237
  // Predicated region
  $region22: #{tpu_custom_call.1} parent=0 // pred_check
    _
  $region23: #{tpu_custom_call.1} parent=0 // pred_check_branch
    %241 = sbr.rel (0) target = $region25
  $region24: #{tpu_custom_call.1} parent=0 // pred_region
    _
  $region25: #{tpu_custom_call.1} parent=0 // pred_fallthru
    _
  // Predicated region
  $region26: #{tpu_custom_call.1} parent=0 // pred_check
    _
  $region27: #{tpu_custom_call.1} parent=0 // pred_check_branch
    %243 = sbr.rel (0) target = $region29
  $region28: #{tpu_custom_call.1} parent=0 // pred_region
    _
  $region29: #{tpu_custom_call.1} parent=0 // pred_fallthru
    _

</llo_original>
